<compile_context>
chip_gen: v7x
topology: tpu7x:2x2x1
jax: 0.10.0
libtpu: 0.0.40
codegen_flags: <defaults>
</compile_context>

<pallas_src>
import jax
import jax.numpy as jnp
from jax.experimental import pallas as pl
from jax.experimental.pallas import tpu as pltpu


def pam_kernel(x_q_ref, x_kv_ref, wq_ref, bq_ref, wkv_ref, bkv_ref, gamma_ref,
               o_ref, m_ref, l_ref, acc_ref):
    ki = pl.program_id(2)

    @pl.when(ki == 0)
    def _():
        m_ref[...] = jnp.full(m_ref.shape, -jnp.inf, dtype=jnp.float32)
        l_ref[...] = jnp.zeros_like(l_ref)
        acc_ref[...] = jnp.zeros_like(acc_ref)

    x_q = x_q_ref[0]                                   # (C, TQ) f32 (residual)
    x_kv = x_kv_ref[0]                                 # (C, TK) f32

    # 1x1 convs as W @ x (lane dim stays N).  bf16 MXU operands, f32 accum,
    # biases added in f32.  k/v fused into one MXU push.
    q = jnp.dot(wq_ref[...], x_q.astype(jnp.bfloat16),
                preferred_element_type=jnp.float32) + bq_ref[...]      # (PQ, TQ)
    kv = jnp.dot(wkv_ref[...], x_kv.astype(jnp.bfloat16),
                 preferred_element_type=jnp.float32) + bkv_ref[...]    # (PQ+C, TK)
    pq = wq_ref.shape[0]
    k = kv[:pq]                                        # (PQ, TK); padded rows are 0
    v = kv[pq:]                                        # (C, TK)

    # energy_T[j, i] = <k_j, q_i>.  Padded channel rows are zero on both sides
    # so they contribute nothing.  k is only (PQ=8, TK) -> ~1-vreg transpose.
    energy = jnp.dot(k.T.astype(jnp.bfloat16), q.astype(jnp.bfloat16),
                     preferred_element_type=jnp.float32)               # (TK, TQ)

    # Online softmax over keys (axis 0); stats in f32; normalization deferred.
    m_prev = m_ref[...]                                                # (1, TQ)
    m_new = jnp.maximum(m_prev, jnp.max(energy, axis=0, keepdims=True))
    p = jnp.exp(energy - m_new)                                        # (TK, TQ)
    alpha = jnp.exp(m_prev - m_new)                                    # (1, TQ)
    l_ref[...] = alpha * l_ref[...] + jnp.sum(p, axis=0, keepdims=True)
    acc_ref[...] = alpha * acc_ref[...] + jnp.dot(
        v.astype(jnp.bfloat16), p.astype(jnp.bfloat16),
        preferred_element_type=jnp.float32)                            # (C, TQ)
    m_ref[...] = m_new

    @pl.when(ki == pl.num_programs(2) - 1)
    def _():
        gamma = gamma_ref[0]                             # SMEM scalar
        inv_l = pl.reciprocal(l_ref[...], approx=True)   # EUP; deferred norm
        o_ref[0] = gamma * (acc_ref[...] * inv_l) + x_q  # lane-dense store


def pam_module_forward(x_nchw, wq, bq, wk, bk, wv, bv, gamma, *, tq=128, tk=128):
    """PAM_Module forward.

    x_nchw: (B, C, H, W) float32.
    wq, wk: (C//8, C); bq, bk: (C//8,); wv: (C, C); bv: (C,)  (PyTorch Conv2d
    1x1 weights with the trailing 1x1 squeezed).  gamma: (1,) float32.
    """
    B, C, H, W = x_nchw.shape
    N = H * W
    C8 = wq.shape[0]
    assert N % tq == 0 and N % tk == 0, "H*W must be divisible by tile sizes"

    # NCHW -> (B, C, N): reshape only; N stays the lane-dense last dim.
    x_bcn = x_nchw.reshape(B, C, N)

    # Pad q/k projections to a sublane multiple (zero rows add nothing to the
    # energy contraction) and fuse [Wk; Wv] so k/v come from one matmul.
    pq = ((C8 + 7) // 8) * 8
    wq_pad = jnp.zeros((pq, C), jnp.float32).at[:C8].set(wq)
    bq_pad = jnp.zeros((pq, 1), jnp.float32).at[:C8, 0].set(bq)
    wkv = jnp.zeros((pq + C, C), jnp.float32).at[:C8].set(wk).at[pq:].set(wv)
    bkv = jnp.zeros((pq + C, 1), jnp.float32).at[:C8, 0].set(bk).at[pq:, 0].set(bv)

    wq_b = wq_pad.astype(jnp.bfloat16)      # bf16 MXU operands (f32 accumulate)
    wkv_b = wkv.astype(jnp.bfloat16)
    gamma1 = gamma.reshape((1,)).astype(jnp.float32)

    grid = (B, N // tq, N // tk)            # batch, query tiles, key tiles

    grid_spec = pltpu.PrefetchScalarGridSpec(
        num_scalar_prefetch=0,
        grid=grid,
        in_specs=[
            pl.BlockSpec((1, C, tq), lambda b, qi, ki: (b, 0, qi)),   # x (queries)
            pl.BlockSpec((1, C, tk), lambda b, qi, ki: (b, 0, ki)),   # x (keys/vals)
            pl.BlockSpec((pq, C), lambda b, qi, ki: (0, 0)),          # Wq (padded)
            pl.BlockSpec((pq, 1), lambda b, qi, ki: (0, 0)),          # bq (padded)
            pl.BlockSpec((pq + C, C), lambda b, qi, ki: (0, 0)),      # [Wk; Wv]
            pl.BlockSpec((pq + C, 1), lambda b, qi, ki: (0, 0)),      # [bk; bv]
            pl.BlockSpec(memory_space=pltpu.MemorySpace.SMEM),        # gamma
        ],
        out_specs=pl.BlockSpec((1, C, tq), lambda b, qi, ki: (b, 0, qi)),
        scratch_shapes=[
            pltpu.VMEM((1, tq), jnp.float32),   # running max m
            pltpu.VMEM((1, tq), jnp.float32),   # running sum l
            pltpu.VMEM((C, tq), jnp.float32),   # un-normalized output accumulator
        ],
    )

    out_bcn = pl.pallas_call(
        pam_kernel,
        out_shape=jax.ShapeDtypeStruct((B, C, N), jnp.float32),
        grid_spec=grid_spec,
        compiler_params=pltpu.CompilerParams(
            dimension_semantics=("parallel", "parallel", "arbitrary"),
            vmem_limit_bytes=32 * 1024 * 1024,
        ),
    )(x_bcn, x_bcn, wq_b, bq_pad, wkv_b, bkv, gamma1)

    return out_bcn.reshape(B, C, H, W)


def pam_reference(x_nchw, wq, bq, wk, bk, wv, bv, gamma):
    """Pure-JAX f32 reference mirroring the PyTorch forward."""
    B, C, H, W = x_nchw.shape
    N = H * W
    x_bcn = x_nchw.reshape(B, C, N)
    q = jnp.einsum('oc,bcn->bon', wq, x_bcn) + bq.reshape(1, -1, 1)   # (B, C8, N)
    k = jnp.einsum('oc,bcn->bon', wk, x_bcn) + bk.reshape(1, -1, 1)   # (B, C8, N)
    v = jnp.einsum('oc,bcn->bon', wv, x_bcn) + bv.reshape(1, -1, 1)   # (B, C, N)
    energy = jnp.einsum('bci,bcj->bij', q, k)                         # (B, Nq, Nk)
    attn = jax.nn.softmax(energy, axis=-1)
    out = jnp.einsum('bcj,bij->bci', v, attn)                         # (B, C, N)
    return gamma.reshape(()) * out.reshape(B, C, H, W) + x_nchw


if __name__ == "__main__":
    key = jax.random.PRNGKey(0)
    B, C, H, W = 2, 32, 16, 16          # in_dim=32 -> C//8 = 4, N = 256
    C8 = C // 8

    ks = jax.random.split(key, 8)
    x = jax.random.normal(ks[0], (B, C, H, W), dtype=jnp.float32)

    # PyTorch Conv2d 1x1 weights (out_c, in_c), trailing 1x1 squeezed.
    wq = jax.random.normal(ks[1], (C8, C), dtype=jnp.float32) * 0.1
    bq = jax.random.normal(ks[2], (C8,), dtype=jnp.float32) * 0.1
    wk = jax.random.normal(ks[3], (C8, C), dtype=jnp.float32) * 0.1
    bk = jax.random.normal(ks[4], (C8,), dtype=jnp.float32) * 0.1
    wv = jax.random.normal(ks[5], (C, C), dtype=jnp.float32) * 0.1
    bv = jax.random.normal(ks[6], (C,), dtype=jnp.float32) * 0.1
    # PyTorch inits gamma to zeros (out == x); use a nonzero value so the
    # attention path is actually exercised by the check.
    gamma = jnp.array([0.5], dtype=jnp.float32)

    out = pam_module_forward(x, wq, bq, wk, bk, wv, bv, gamma)
    out = jax.block_until_ready(out)

    ref = pam_reference(x, wq, bq, wk, bk, wv, bv, gamma)
    assert out.shape == (B, C, H, W)
    # bf16 MXU operands (f32 accumulation, f32 softmax stats) => ~1e-2-level
    # agreement with the f32 reference.
    max_err = float(jnp.max(jnp.abs(out - ref)))
    assert jnp.allclose(out, ref, atol=2e-2, rtol=2e-2), (
        f"mismatch vs reference (max abs err {max_err})")

    print("KERNEL_OK")
</pallas_src>

<mosaic_0001>
module attributes {stable_mosaic.version = 11 : i64} {
  func.func @pam_kernel(%arg0: i32, %arg1: i32, %arg2: i32, %arg3: memref<1x32x128xf32, #tpu.memory_space<vmem>>, %arg4: memref<1x32x128xf32, #tpu.memory_space<vmem>>, %arg5: memref<8x32xbf16, #tpu.memory_space<vmem>>, %arg6: memref<8x1xf32, #tpu.memory_space<vmem>>, %arg7: memref<40x32xbf16, #tpu.memory_space<vmem>>, %arg8: memref<40x1xf32, #tpu.memory_space<vmem>>, %arg9: memref<1xf32, #tpu.memory_space<smem>>, %arg10: memref<1x32x128xf32, #tpu.memory_space<vmem>>, %arg11: memref<1x128xf32, #tpu.memory_space<vmem>>, %arg12: memref<1x128xf32, #tpu.memory_space<vmem>>, %arg13: memref<32x128xf32, #tpu.memory_space<vmem>>) attributes {dimension_semantics = [#tpu.dimension_semantics<parallel>, #tpu.dimension_semantics<parallel>, #tpu.dimension_semantics<arbitrary>], iteration_bounds = array<i64: 2, 2, 2>, scalar_prefetch = 0 : i64, scratch_operands = 3 : i64, tpu.core_type = #tpu.core_type<tc>, window_params = [{transform_indices = @transform_0, window_bounds = array<i64: 1, 32, 128>}, {transform_indices = @transform_1, window_bounds = array<i64: 1, 32, 128>}, {pipeline_mode = #tpu.pipeline_mode<synchronous>, transform_indices = @transform_2, window_bounds = array<i64: 8, 32>}, {pipeline_mode = #tpu.pipeline_mode<synchronous>, transform_indices = @transform_3, window_bounds = array<i64: 8, 1>}, {pipeline_mode = #tpu.pipeline_mode<synchronous>, transform_indices = @transform_4, window_bounds = array<i64: 40, 32>}, {pipeline_mode = #tpu.pipeline_mode<synchronous>, transform_indices = @transform_5, window_bounds = array<i64: 40, 1>}, {transform_indices = @transform_6, window_bounds = array<i64: 1>}, {transform_indices = @transform_7, window_bounds = array<i64: 1, 32, 128>}]} {
    %c0_i32 = arith.constant 0 : i32
    %0 = arith.cmpi eq, %arg2, %c0_i32 : i32
    %1 = arith.extui %0 : i1 to i32
    %c0_i32_0 = arith.constant 0 : i32
    %2 = arith.cmpi ne, %1, %c0_i32_0 : i32
    scf.if %2 {
      %cst_32 = arith.constant 0xFF800000 : f32
      %52 = vector.broadcast %cst_32 : f32 to vector<1x128xf32>
      %c0_33 = arith.constant 0 : index
      %c0_34 = arith.constant 0 : index
      %53 = vector.load %arg11[%c0_33, %c0_34] : memref<1x128xf32, #tpu.memory_space<vmem>>, vector<1x128xf32>
      tpu.vector_store %arg11[%c0_33, %c0_34], %52 {strides = array<i32>} : memref<1x128xf32, #tpu.memory_space<vmem>>, vector<1x128xf32>,
      %cst_35 = arith.constant 0.000000e+00 : f32
      %54 = vector.broadcast %cst_35 : f32 to vector<1x128xf32>
      %c0_36 = arith.constant 0 : index
      %c0_37 = arith.constant 0 : index
      %55 = vector.load %arg12[%c0_36, %c0_37] : memref<1x128xf32, #tpu.memory_space<vmem>>, vector<1x128xf32>
      tpu.vector_store %arg12[%c0_36, %c0_37], %54 {strides = array<i32>} : memref<1x128xf32, #tpu.memory_space<vmem>>, vector<1x128xf32>,
      %cst_38 = arith.constant 0.000000e+00 : f32
      %56 = vector.broadcast %cst_38 : f32 to vector<32x128xf32>
      %c0_39 = arith.constant 0 : index
      %c0_40 = arith.constant 0 : index
      %57 = vector.load %arg13[%c0_39, %c0_40] : memref<32x128xf32, #tpu.memory_space<vmem>>, vector<32x128xf32>
      tpu.vector_store %arg13[%c0_39, %c0_40], %56 {strides = array<i32>} : memref<32x128xf32, #tpu.memory_space<vmem>>, vector<32x128xf32>,
    } else {
    }
    %c0 = arith.constant 0 : index
    %c0_1 = arith.constant 0 : index
    %c0_2 = arith.constant 0 : index
    %3 = vector.load %arg3[%c0, %c0_1, %c0_2] : memref<1x32x128xf32, #tpu.memory_space<vmem>>, vector<1x32x128xf32>
    %4 = vector.shape_cast %3 : vector<1x32x128xf32> to vector<32x128xf32>
    %c0_3 = arith.constant 0 : index
    %c0_4 = arith.constant 0 : index
    %c0_5 = arith.constant 0 : index
    %5 = vector.load %arg4[%c0_3, %c0_4, %c0_5] : memref<1x32x128xf32, #tpu.memory_space<vmem>>, vector<1x32x128xf32>
    %6 = vector.shape_cast %5 : vector<1x32x128xf32> to vector<32x128xf32>
    %c0_6 = arith.constant 0 : index
    %c0_7 = arith.constant 0 : index
    %7 = vector.load %arg5[%c0_6, %c0_7] : memref<8x32xbf16, #tpu.memory_space<vmem>>, vector<8x32xbf16>
    %8 = arith.truncf %4 : vector<32x128xf32> to vector<32x128xbf16>
    %cst = arith.constant dense<0.000000e+00> : vector<8x128xf32>
    %9 = tpu.matmul %7, %8, %cst {dimension_numbers = #tpu.dot_dimension_numbers<[1], [0], [0], [1], [0, 0, 1, 1], [], []>} : vector<8x32xbf16>, vector<32x128xbf16>, vector<8x128xf32> -> vector<8x128xf32>
    %c0_8 = arith.constant 0 : index
    %c0_9 = arith.constant 0 : index
    %10 = vector.load %arg6[%c0_8, %c0_9] : memref<8x1xf32, #tpu.memory_space<vmem>>, vector<8x1xf32>
    %11 = vector.broadcast %10 : vector<8x1xf32> to vector<8x128xf32>
    %12 = arith.addf %9, %11 : vector<8x128xf32>
    %c0_10 = arith.constant 0 : index
    %c0_11 = arith.constant 0 : index
    %13 = vector.load %arg7[%c0_10, %c0_11] : memref<40x32xbf16, #tpu.memory_space<vmem>>, vector<40x32xbf16>
    %14 = arith.truncf %6 : vector<32x128xf32> to vector<32x128xbf16>
    %cst_12 = arith.constant dense<0.000000e+00> : vector<40x128xf32>
    %15 = tpu.matmul %13, %14, %cst_12 {dimension_numbers = #tpu.dot_dimension_numbers<[1], [0], [0], [1], [0, 0, 1, 1], [], []>} : vector<40x32xbf16>, vector<32x128xbf16>, vector<40x128xf32> -> vector<40x128xf32>
    %c0_13 = arith.constant 0 : index
    %c0_14 = arith.constant 0 : index
    %16 = vector.load %arg8[%c0_13, %c0_14] : memref<40x1xf32, #tpu.memory_space<vmem>>, vector<40x1xf32>
    %17 = vector.broadcast %16 : vector<40x1xf32> to vector<40x128xf32>
    %18 = arith.addf %15, %17 : vector<40x128xf32>
    %19 = vector.extract_strided_slice %18 {offsets = [0, 0], sizes = [8, 128], strides = [1, 1]} : vector<40x128xf32> to vector<8x128xf32>
    %20 = vector.extract_strided_slice %18 {offsets = [8, 0], sizes = [32, 128], strides = [1, 1]} : vector<40x128xf32> to vector<32x128xf32>
    %21 = tpu.transpose %19, [1, 0] : vector<8x128xf32> -> vector<128x8xf32>
    %22 = arith.truncf %21 : vector<128x8xf32> to vector<128x8xbf16>
    %23 = arith.truncf %12 : vector<8x128xf32> to vector<8x128xbf16>
    %cst_15 = arith.constant dense<0.000000e+00> : vector<128x128xf32>
    %24 = tpu.matmul %22, %23, %cst_15 {dimension_numbers = #tpu.dot_dimension_numbers<[1], [0], [0], [1], [0, 0, 1, 1], [], []>} : vector<128x8xbf16>, vector<8x128xbf16>, vector<128x128xf32> -> vector<128x128xf32>
    %c0_16 = arith.constant 0 : index
    %c0_17 = arith.constant 0 : index
    %25 = vector.load %arg11[%c0_16, %c0_17] : memref<1x128xf32, #tpu.memory_space<vmem>>, vector<1x128xf32>
    %cst_18 = arith.constant dense<0xFF800000> : vector<128xf32>
    %26 = vector.multi_reduction <maximumf>, %24, %cst_18 [0] : vector<128x128xf32> to vector<128xf32>
    %27 = vector.shape_cast %26 : vector<128xf32> to vector<1x128xf32>
    %28 = arith.maximumf %25, %27 : vector<1x128xf32>
    %29 = vector.broadcast %28 : vector<1x128xf32> to vector<128x128xf32>
    %30 = arith.subf %24, %29 : vector<128x128xf32>
    %31 = math.exp %30 : vector<128x128xf32>
    %32 = arith.subf %25, %28 : vector<1x128xf32>
    %33 = math.exp %32 : vector<1x128xf32>
    %c0_19 = arith.constant 0 : index
    %c0_20 = arith.constant 0 : index
    %34 = vector.load %arg12[%c0_19, %c0_20] : memref<1x128xf32, #tpu.memory_space<vmem>>, vector<1x128xf32>
    %35 = arith.mulf %33, %34 : vector<1x128xf32>
    %cst_21 = arith.constant dense<0.000000e+00> : vector<128xf32>
    %36 = vector.multi_reduction <add>, %31, %cst_21 [0] : vector<128x128xf32> to vector<128xf32>
    %37 = vector.shape_cast %36 : vector<128xf32> to vector<1x128xf32>
    %38 = arith.addf %35, %37 : vector<1x128xf32>
    %c0_22 = arith.constant 0 : index
    %c0_23 = arith.constant 0 : index
    %39 = vector.load %arg12[%c0_22, %c0_23] : memref<1x128xf32, #tpu.memory_space<vmem>>, vector<1x128xf32>
    tpu.vector_store %arg12[%c0_22, %c0_23], %38 {strides = array<i32>} : memref<1x128xf32, #tpu.memory_space<vmem>>, vector<1x128xf32>,
    %c0_24 = arith.constant 0 : index
    %c0_25 = arith.constant 0 : index
    %40 = vector.load %arg13[%c0_24, %c0_25] : memref<32x128xf32, #tpu.memory_space<vmem>>, vector<32x128xf32>
    %41 = vector.broadcast %33 : vector<1x128xf32> to vector<32x128xf32>
    %42 = arith.mulf %41, %40 : vector<32x128xf32>
    %43 = arith.truncf %20 : vector<32x128xf32> to vector<32x128xbf16>
    %44 = arith.truncf %31 : vector<128x128xf32> to vector<128x128xbf16>
    %cst_26 = arith.constant dense<0.000000e+00> : vector<32x128xf32>
    %45 = tpu.matmul %43, %44, %cst_26 {dimension_numbers = #tpu.dot_dimension_numbers<[1], [0], [0], [1], [0, 0, 1, 1], [], []>} : vector<32x128xbf16>, vector<128x128xbf16>, vector<32x128xf32> -> vector<32x128xf32>
    %46 = arith.addf %42, %45 : vector<32x128xf32>
    %c0_27 = arith.constant 0 : index
    %c0_28 = arith.constant 0 : index
    %47 = vector.load %arg13[%c0_27, %c0_28] : memref<32x128xf32, #tpu.memory_space<vmem>>, vector<32x128xf32>
    tpu.vector_store %arg13[%c0_27, %c0_28], %46 {strides = array<i32>} : memref<32x128xf32, #tpu.memory_space<vmem>>, vector<32x128xf32>,
    %c0_29 = arith.constant 0 : index
    %c0_30 = arith.constant 0 : index
    %48 = vector.load %arg11[%c0_29, %c0_30] : memref<1x128xf32, #tpu.memory_space<vmem>>, vector<1x128xf32>
    tpu.vector_store %arg11[%c0_29, %c0_30], %28 {strides = array<i32>} : memref<1x128xf32, #tpu.memory_space<vmem>>, vector<1x128xf32>,
    %c1_i32 = arith.constant 1 : i32
    %49 = arith.cmpi eq, %arg2, %c1_i32 : i32
    %50 = arith.extui %49 : i1 to i32
    %c0_i32_31 = arith.constant 0 : i32
    %51 = arith.cmpi ne, %50, %c0_i32_31 : i32
    scf.if %51 {
      %c0_32 = arith.constant 0 : index
      %52 = memref.load %arg9[%c0_32] : memref<1xf32, #tpu.memory_space<smem>>
      %c0_33 = arith.constant 0 : index
      %c0_34 = arith.constant 0 : index
      %53 = vector.load %arg12[%c0_33, %c0_34] : memref<1x128xf32, #tpu.memory_space<vmem>>, vector<1x128xf32>
      %54 = tpu.reciprocal %53 {approx = true} : vector<1x128xf32> -> vector<1x128xf32>
      %c0_35 = arith.constant 0 : index
      %c0_36 = arith.constant 0 : index
      %55 = vector.load %arg13[%c0_35, %c0_36] : memref<32x128xf32, #tpu.memory_space<vmem>>, vector<32x128xf32>
      %56 = vector.broadcast %54 : vector<1x128xf32> to vector<32x128xf32>
      %57 = arith.mulf %55, %56 : vector<32x128xf32>
      %58 = vector.broadcast %52 : f32 to vector<32x128xf32>
      %59 = arith.mulf %58, %57 : vector<32x128xf32>
      %60 = arith.addf %59, %4 : vector<32x128xf32>
      %c0_37 = arith.constant 0 : index
      %c0_38 = arith.constant 0 : index
      %c0_39 = arith.constant 0 : index
      %61 = vector.load %arg10[%c0_37, %c0_38, %c0_39] : memref<1x32x128xf32, #tpu.memory_space<vmem>>, vector<1x32x128xf32>
      %62 = vector.shape_cast %61 : vector<1x32x128xf32> to vector<32x128xf32>
      %63 = vector.shape_cast %60 : vector<32x128xf32> to vector<1x32x128xf32>
      tpu.vector_store %arg10[%c0_37, %c0_38, %c0_39], %63 {strides = array<i32>} : memref<1x32x128xf32, #tpu.memory_space<vmem>>, vector<1x32x128xf32>,
    } else {
    }
    return
  }
  func.func @transform_0(%arg0: i32, %arg1: i32, %arg2: i32) -> (i32, i32, i32) {
    %c0_i32 = arith.constant 0 : i32
    %c0_i32_0 = arith.constant 0 : i32
    return %arg0, %c0_i32, %arg1 : i32, i32, i32
  }
  func.func @transform_1(%arg0: i32, %arg1: i32, %arg2: i32) -> (i32, i32, i32) {
    %c0_i32 = arith.constant 0 : i32
    %c0_i32_0 = arith.constant 0 : i32
    return %arg0, %c0_i32, %arg2 : i32, i32, i32
  }
  func.func @transform_2(%arg0: i32, %arg1: i32, %arg2: i32) -> (i32, i32) {
    %c0_i32 = arith.constant 0 : i32
    %c0_i32_0 = arith.constant 0 : i32
    %c0_i32_1 = arith.constant 0 : i32
    return %c0_i32, %c0_i32_0 : i32, i32
  }
  func.func @transform_3(%arg0: i32, %arg1: i32, %arg2: i32) -> (i32, i32) {
    %c0_i32 = arith.constant 0 : i32
    %c0_i32_0 = arith.constant 0 : i32
    %c0_i32_1 = arith.constant 0 : i32
    return %c0_i32, %c0_i32_0 : i32, i32
  }
  func.func @transform_4(%arg0: i32, %arg1: i32, %arg2: i32) -> (i32, i32) {
    %c0_i32 = arith.constant 0 : i32
    %c0_i32_0 = arith.constant 0 : i32
    %c0_i32_1 = arith.constant 0 : i32
    return %c0_i32, %c0_i32_0 : i32, i32
  }
  func.func @transform_5(%arg0: i32, %arg1: i32, %arg2: i32) -> (i32, i32) {
    %c0_i32 = arith.constant 0 : i32
    %c0_i32_0 = arith.constant 0 : i32
    %c0_i32_1 = arith.constant 0 : i32
    return %c0_i32, %c0_i32_0 : i32, i32
  }
  func.func @transform_6(%arg0: i32, %arg1: i32, %arg2: i32) -> i32 {
    %c0_i32 = arith.constant 0 : i32
    %c0_i32_0 = arith.constant 0 : i32
    return %c0_i32 : i32
  }
  func.func @transform_7(%arg0: i32, %arg1: i32, %arg2: i32) -> (i32, i32, i32) {
    %c0_i32 = arith.constant 0 : i32
    %c0_i32_0 = arith.constant 0 : i32
    return %arg0, %c0_i32, %arg1 : i32, i32, i32
  }
}

</mosaic_0001>

<llo_original>
// kernel: tpu_custom_call.1
$region0: #{tpu_custom_call.1}
  #allocation0 [shape = 'u32[]', space=smem, size = 0x4, offset = 0x4, fixed_abs, tag = 'smem constant byte address 0x4 - core index']
  #allocation1 [shape = 'u32[144,128]{1,0:T(1,128)}', space=vmem, size = 0x12000, scoped, tag = 'internal scratch']
  #allocation2 [shape = 'f32[1,128]{1,0:T(1,128)}', space=vmem, size = 0x200, scoped, tag = 'scratch operand']
  #allocation3 [shape = 'f32[1,128]{1,0:T(1,128)}', space=vmem, size = 0x200, scoped, tag = 'scratch operand']
  #allocation4 [shape = 'f32[32,128]{1,0:T(8,128)}', space=vmem, size = 0x4000, scoped, tag = 'scratch operand']
  #allocation5 [shape = 'f32[1]{0:T(128)S(6)}', space=smem, size = 0x200, scoped, tag = 'scoped memory for tpu_custom_call.1']
  %s0 = inlined_call_operand.hbm [shape: f32[2,32,256], index: 0, kind: input, shape index: {}]
  %s1 = inlined_call_operand.hbm [shape: f32[2,32,256], index: 1, kind: input, shape index: {}]
  %s2 = inlined_call_operand.vmem [shape: bf16[8,32], index: 2, kind: input, shape index: {}]
  %s3 = inlined_call_operand.vmem [shape: f32[8,1], index: 3, kind: input, shape index: {}]
  %s4 = inlined_call_operand.vmem [shape: bf16[40,32], index: 4, kind: input, shape index: {}]
  %s5 = inlined_call_operand.vmem [shape: f32[40,1], index: 5, kind: input, shape index: {}]
  %s6 = inlined_call_operand.<no memory space> [shape: f32[1], index: 6, kind: input, shape index: {}]
  %s7 = inlined_call_operand.hbm [shape: f32[2,32,256], index: 7, kind: output, shape index: {}]
  %s8 = sld [smem:[#allocation0]]
  $region77: #{tpu_custom_call.1} parent=0
    _
  %s10 = ssub.s32 1, %s8
  %s11 = scalar_select 0, %s10, %s8
  %12 = sst [smem:[#allocation5]] %s6
  $region1: #{tpu_custom_call.1} parent=0
    #allocation6 [shape = 'u8[32768]{0}', space=vmem, size = 0x8000, scoped, tag = 'input window, operand 0']
    #allocation7 [shape = 's32[2]{0}', space=sflag, size = 0x8, scoped, tag = 'scoped memory for tpu_custom_call.1']
    #allocation8 [shape = 's32[2]{0}', space=sflag, size = 0x8, scoped, tag = 'scoped memory for tpu_custom_call.1']
    #allocation9 [shape = 'u8[32768]{0}', space=vmem, size = 0x8000, scoped, tag = 'input window, operand 1']
    #allocation10 [shape = 's32[2]{0}', space=sflag, size = 0x8, scoped, tag = 'scoped memory for tpu_custom_call.1']
    #allocation11 [shape = 'u8[32768]{0}', space=vmem, size = 0x8000, scoped, tag = 'output window, operand 0']
    %13 = vsyncpa [#allocation7], 0
    %s14 = scalar_lea.sflag [#allocation7], 1
    %15 = vsyncpa %s14, 0
    %16 = vsyncpa [#allocation10], 0
    %s17 = scalar_lea.sflag [#allocation10], 1
    %18 = vsyncpa %s17, 0
    %19 = vsyncpa [#allocation8], 0
    %s20 = scalar_lea.sflag [#allocation8], 1
    %21 = vsyncpa %s20, 0
    loop: start=0, step=1, limit=10
    $region2: #{tpu_custom_call.1} parent=1 // loop_pre_header
      _
    $region3: #{tpu_custom_call.1} parent=1 // loop_header
      %s23 = sphi 0, %s27
      %p24 = scmp.ge.s32.totalorder %s23, 10
      %s30 = sphi 0, %s49
      %s31 = sphi 0, %s45
      %s32 = sphi 0, %s41
      %s33 = sphi 0, %s30
      %s34 = sphi 0, %s31
      %s35 = sphi 0, %s32
      %s36 = sphi 0, %s33
      %s37 = sphi 0, %s34
      %s38 = sphi 0, %s35
      %s54 = sphi 0, %s56
      %s57 = sphi 0, %s54
      %s58 = sphi 0, %s57
      %s74 = sphi 0, %s58
      %s82 = sphi 0, %s84
      %s85 = sphi 0, %s82
      %s86 = sphi 0, %s85
      %s102 = sphi 0, %s86
      %s106 = sphi 0, %s106
      %s108 = sphi 0, %s106
      %s109 = sphi 0, %s108
      %s123 = sphi 0, %s109
      %s127 = sphi 0, %s127
      %s129 = sphi 0, %s127
      %s130 = sphi 0, %s129
      %s144 = sphi 0, %s130
      %s148 = sphi 0, %s148
      %s150 = sphi 0, %s148
      %s151 = sphi 0, %s150
      %s165 = sphi 0, %s151
      %s169 = sphi 0, %s169
      %s171 = sphi 0, %s169
      %s172 = sphi 0, %s171
      %s186 = sphi 0, %s172
      %s190 = sphi 0, %s190
      %s192 = sphi 0, %s190
      %s193 = sphi 0, %s192
      %s207 = sphi 0, %s193
      %s215 = sphi 0, %s217
      %s218 = sphi 0, %s215
      %s219 = sphi 0, %s218
      %s235 = sphi 0, %s219
    $region4: #{tpu_custom_call.1} parent=1 // loop_header_branch
      %26 = sbr.rel (%p24) target = $region8
    $region5: #{tpu_custom_call.1} parent=1 // loop_body
      %s28 = ssub.s32 %s23, 1
      %s29 = ssub.s32 %s23, 2
      %s39 = sadd.s32 1, %s32
      %p40 = scmp.ge.s32.totalorder %s39, 2
      %s41 = scalar_select %p40, 0, %s39
      %s42 = sadd.s32 1, %s31
      %s43 = scalar_select %p40, %s42, %s31
      %p44 = scmp.ge.s32.totalorder %s43, 2
      %s45 = scalar_select %p44, 0, %s43
      %s46 = sadd.s32 1, %s30
      %s47 = scalar_select %p44, %s46, %s30
      %p48 = scmp.ge.s32.totalorder %s47, 2
      %s49 = scalar_select %p48, 0, %s47
      %s50 = ssub.s32 %s30, %s49
      %s51 = ssub.s32 %s31, %s45
      %s52 = sor.u32 %s50, %s51
      %p53 = scmp.eq.s32.totalorder %s52, 0
      %s55 = sadd.s32 %s54, 1
      %s56 = scalar_select %p53, %s54, %s55
      %p59 = pneg %p53
      %p60 = scmp.eq.s32.totalorder %s23, 7
      %p61 = por %p59, %p60
      %p62 = scmp.ne.s32.totalorder %s54, %s57
      %p63 = scmp.eq.s32.totalorder %s23, 0
      %p64 = por %p62, %p63
      %p65 = scmp.ne.s32.totalorder %s54, %s57
      %p66 = scmp.eq.s32.totalorder %s28, 7
      %p67 = por %p65, %p66
      %p68 = scmp.ne.s32.totalorder %s57, %s58
      %p69 = scmp.eq.s32.totalorder %s28, 0
      %p70 = por %p68, %p69
      %p71 = scmp.ne.s32.totalorder %s57, %s58
      %p72 = scmp.eq.s32.totalorder %s29, 7
      %p73 = por %p71, %p72
      %p75 = scmp.ne.s32.totalorder %s58, %s74
      %p76 = scmp.eq.s32.totalorder %s29, 0
      %p77 = por %p75, %p76
      %s78 = ssub.s32 %s30, %s49
      %s79 = ssub.s32 %s32, %s41
      %s80 = sor.u32 %s78, %s79
      %p81 = scmp.eq.s32.totalorder %s80, 0
      %s83 = sadd.s32 %s82, 1
      %s84 = scalar_select %p81, %s82, %s83
      %p87 = pneg %p81
      %p88 = scmp.eq.s32.totalorder %s23, 7
      %p89 = por %p87, %p88
      %p90 = scmp.ne.s32.totalorder %s82, %s85
      %p91 = scmp.eq.s32.totalorder %s23, 0
      %p92 = por %p90, %p91
      %p93 = scmp.ne.s32.totalorder %s82, %s85
      %p94 = scmp.eq.s32.totalorder %s28, 7
      %p95 = por %p93, %p94
      %p96 = scmp.ne.s32.totalorder %s85, %s86
      %p97 = scmp.eq.s32.totalorder %s28, 0
      %p98 = por %p96, %p97
      %p99 = scmp.ne.s32.totalorder %s85, %s86
      %p100 = scmp.eq.s32.totalorder %s29, 7
      %p101 = por %p99, %p100
      %p103 = scmp.ne.s32.totalorder %s86, %s102
      %p104 = scmp.eq.s32.totalorder %s29, 0
      %p105 = por %p103, %p104
      %s107 = sadd.s32 %s106, 1
      %p110 = scmp.eq.s32.totalorder %s23, 7
      %p111 = scmp.ne.s32.totalorder %s106, %s108
      %p112 = scmp.eq.s32.totalorder %s23, 0
      %p113 = por %p111, %p112
      %p114 = scmp.ne.s32.totalorder %s106, %s108
      %p115 = scmp.eq.s32.totalorder %s28, 7
      %p116 = por %p114, %p115
      %p117 = scmp.ne.s32.totalorder %s108, %s109
      %p118 = scmp.eq.s32.totalorder %s28, 0
      %p119 = por %p117, %p118
      %p120 = scmp.ne.s32.totalorder %s108, %s109
      %p121 = scmp.eq.s32.totalorder %s29, 7
      %p122 = por %p120, %p121
      %p124 = scmp.ne.s32.totalorder %s109, %s123
      %p125 = scmp.eq.s32.totalorder %s29, 0
      %p126 = por %p124, %p125
      %s128 = sadd.s32 %s127, 1
      %p131 = scmp.eq.s32.totalorder %s23, 7
      %p132 = scmp.ne.s32.totalorder %s127, %s129
      %p133 = scmp.eq.s32.totalorder %s23, 0
      %p134 = por %p132, %p133
      %p135 = scmp.ne.s32.totalorder %s127, %s129
      %p136 = scmp.eq.s32.totalorder %s28, 7
      %p137 = por %p135, %p136
      %p138 = scmp.ne.s32.totalorder %s129, %s130
      %p139 = scmp.eq.s32.totalorder %s28, 0
      %p140 = por %p138, %p139
      %p141 = scmp.ne.s32.totalorder %s129, %s130
      %p142 = scmp.eq.s32.totalorder %s29, 7
      %p143 = por %p141, %p142
      %p145 = scmp.ne.s32.totalorder %s130, %s144
      %p146 = scmp.eq.s32.totalorder %s29, 0
      %p147 = por %p145, %p146
      %s149 = sadd.s32 %s148, 1
      %p152 = scmp.eq.s32.totalorder %s23, 7
      %p153 = scmp.ne.s32.totalorder %s148, %s150
      %p154 = scmp.eq.s32.totalorder %s23, 0
      %p155 = por %p153, %p154
      %p156 = scmp.ne.s32.totalorder %s148, %s150
      %p157 = scmp.eq.s32.totalorder %s28, 7
      %p158 = por %p156, %p157
      %p159 = scmp.ne.s32.totalorder %s150, %s151
      %p160 = scmp.eq.s32.totalorder %s28, 0
      %p161 = por %p159, %p160
      %p162 = scmp.ne.s32.totalorder %s150, %s151
      %p163 = scmp.eq.s32.totalorder %s29, 7
      %p164 = por %p162, %p163
      %p166 = scmp.ne.s32.totalorder %s151, %s165
      %p167 = scmp.eq.s32.totalorder %s29, 0
      %p168 = por %p166, %p167
      %s170 = sadd.s32 %s169, 1
      %p173 = scmp.eq.s32.totalorder %s23, 7
      %p174 = scmp.ne.s32.totalorder %s169, %s171
      %p175 = scmp.eq.s32.totalorder %s23, 0
      %p176 = por %p174, %p175
      %p177 = scmp.ne.s32.totalorder %s169, %s171
      %p178 = scmp.eq.s32.totalorder %s28, 7
      %p179 = por %p177, %p178
      %p180 = scmp.ne.s32.totalorder %s171, %s172
      %p181 = scmp.eq.s32.totalorder %s28, 0
      %p182 = por %p180, %p181
      %p183 = scmp.ne.s32.totalorder %s171, %s172
      %p184 = scmp.eq.s32.totalorder %s29, 7
      %p185 = por %p183, %p184
      %p187 = scmp.ne.s32.totalorder %s172, %s186
      %p188 = scmp.eq.s32.totalorder %s29, 0
      %p189 = por %p187, %p188
      %s191 = sadd.s32 %s190, 1
      %p194 = scmp.eq.s32.totalorder %s23, 7
      %p195 = scmp.ne.s32.totalorder %s190, %s192
      %p196 = scmp.eq.s32.totalorder %s23, 0
      %p197 = por %p195, %p196
      %p198 = scmp.ne.s32.totalorder %s190, %s192
      %p199 = scmp.eq.s32.totalorder %s28, 7
      %p200 = por %p198, %p199
      %p201 = scmp.ne.s32.totalorder %s192, %s193
      %p202 = scmp.eq.s32.totalorder %s28, 0
      %p203 = por %p201, %p202
      %p204 = scmp.ne.s32.totalorder %s192, %s193
      %p205 = scmp.eq.s32.totalorder %s29, 7
      %p206 = por %p204, %p205
      %p208 = scmp.ne.s32.totalorder %s193, %s207
      %p209 = scmp.eq.s32.totalorder %s29, 0
      %p210 = por %p208, %p209
      %s211 = ssub.s32 %s30, %s49
      %s212 = ssub.s32 %s31, %s45
      %s213 = sor.u32 %s211, %s212
      %p214 = scmp.eq.s32.totalorder %s213, 0
      %s216 = sadd.s32 %s215, 1
      %s217 = scalar_select %p214, %s215, %s216
      %p220 = pneg %p214
      %p221 = scmp.eq.s32.totalorder %s23, 7
      %p222 = por %p220, %p221
      %p223 = scmp.ne.s32.totalorder %s215, %s218
      %p224 = scmp.eq.s32.totalorder %s23, 0
      %p225 = por %p223, %p224
      %p226 = scmp.ne.s32.totalorder %s215, %s218
      %p227 = scmp.eq.s32.totalorder %s28, 7
      %p228 = por %p226, %p227
      %p229 = scmp.ne.s32.totalorder %s218, %s219
      %p230 = scmp.eq.s32.totalorder %s28, 0
      %p231 = por %p229, %p230
      %p232 = scmp.ne.s32.totalorder %s218, %s219
      %p233 = scmp.eq.s32.totalorder %s29, 7
      %p234 = por %p232, %p233
      %p236 = scmp.ne.s32.totalorder %s219, %s235
      %p237 = scmp.eq.s32.totalorder %s29, 0
      %p238 = por %p236, %p237
      %p239 = scmp.le.s32.totalorder 1, %s23
      %p240 = scmp.lt.s32.totalorder %s23, 9
      %p241 = pnand %p239, %p240
      %p242 = pneg %p241
      // Predicated region
      $region9: #{tpu_custom_call.1} parent=5 // pred_check
        _
      $region10: #{tpu_custom_call.1} parent=5 // pred_check_branch
        %244 = sbr.rel (%p241) target = $region12
      $region11: #{tpu_custom_call.1} parent=5 // pred_region
        %s245 = ssub.s32 %s23, 1
        // Predicated region
        $region13: #{tpu_custom_call.1} parent=11 // pred_check
          %p246 = pneg %p119
        $region14: #{tpu_custom_call.1} parent=11 // pred_check_branch
          %248 = sbr.rel (%p246) target = $region16
        $region15: #{tpu_custom_call.1} parent=11 // pred_region
          _
        $region16: #{tpu_custom_call.1} parent=11 // pred_fallthru
          _
        // Predicated region
        $region17: #{tpu_custom_call.1} parent=11 // pred_check
          %p249 = pneg %p140
        $region18: #{tpu_custom_call.1} parent=11 // pred_check_branch
          %251 = sbr.rel (%p249) target = $region20
        $region19: #{tpu_custom_call.1} parent=11 // pred_region
          _
        $region20: #{tpu_custom_call.1} parent=11 // pred_fallthru
          _
        // Predicated region
        $region21: #{tpu_custom_call.1} parent=11 // pred_check
          %p252 = pneg %p161
        $region22: #{tpu_custom_call.1} parent=11 // pred_check_branch
          %254 = sbr.rel (%p252) target = $region24
        $region23: #{tpu_custom_call.1} parent=11 // pred_region
          _
        $region24: #{tpu_custom_call.1} parent=11 // pred_fallthru
          _
        // Predicated region
        $region25: #{tpu_custom_call.1} parent=11 // pred_check
          %p255 = pneg %p182
        $region26: #{tpu_custom_call.1} parent=11 // pred_check_branch
          %257 = sbr.rel (%p255) target = $region28
        $region27: #{tpu_custom_call.1} parent=11 // pred_region
          _
        $region28: #{tpu_custom_call.1} parent=11 // pred_fallthru
          _
        // Predicated region
        $region29: #{tpu_custom_call.1} parent=11 // pred_check
          %p258 = pneg %p203
        $region30: #{tpu_custom_call.1} parent=11 // pred_check_branch
          %260 = sbr.rel (%p258) target = $region32
        $region31: #{tpu_custom_call.1} parent=11 // pred_region
          _
        $region32: #{tpu_custom_call.1} parent=11 // pred_fallthru
          _
      $region12: #{tpu_custom_call.1} parent=5 // pred_fallthru
        _
      %p261 = scmp.lt.s32.totalorder %s23, 8
      // Predicated region
      $region33: #{tpu_custom_call.1} parent=5 // pred_check
        %p262 = pneg %p261
      $region34: #{tpu_custom_call.1} parent=5 // pred_check_branch
        %264 = sbr.rel (%p262) target = $region36
      $region35: #{tpu_custom_call.1} parent=5 // pred_region
        // Predicated region
        $region37: #{tpu_custom_call.1} parent=35 // pred_check
          %p265 = pneg %p64
        $region38: #{tpu_custom_call.1} parent=35 // pred_check_branch
          %267 = sbr.rel (%p265) target = $region40
        $region39: #{tpu_custom_call.1} parent=35 // pred_region
          %s268 = sand.u32 %s54, 1
          %s269 = scalar_lea.sflag [#allocation7], %s268
          %s270 = sand.u32 %s54, 1
          %s271 = smul.addr %s270, 32
          %s272 = scalar_lea.vmem [#allocation6], %s271
          %s274 = ssub.s32 512, 512
          %275 = vsyncadd %s269, %s274
          %s276 = smul.addr %s30, 8
          %s277 = sadd.s32 %s31, %s276
          %s278 = smul.addr %s277, 128
          %s279 = scalar_lea.hbm %s0, %s278
          %s280 = sshll.u32 %s272, 4
          %s281 = int_to_ptr.vmem [resolvable:$true] %s280
          %286 = dma.hbm_to_vmem [thread:$0]  %s279, 512, %s281, %s269, 256, 128, 8
        $region40: #{tpu_custom_call.1} parent=35 // pred_fallthru
          _
        // Predicated region
        $region41: #{tpu_custom_call.1} parent=35 // pred_check
          %p287 = pneg %p92
        $region42: #{tpu_custom_call.1} parent=35 // pred_check_branch
          %289 = sbr.rel (%p287) target = $region44
        $region43: #{tpu_custom_call.1} parent=35 // pred_region
          %s290 = sand.u32 %s82, 1
          %s291 = scalar_lea.sflag [#allocation10], %s290
          %s292 = sand.u32 %s82, 1
          %s293 = smul.addr %s292, 32
          %s294 = scalar_lea.vmem [#allocation9], %s293
          %s296 = ssub.s32 512, 512
          %297 = vsyncadd %s291, %s296
          %s298 = smul.addr %s30, 8
          %s299 = sadd.s32 %s32, %s298
          %s300 = smul.addr %s299, 128
          %s301 = scalar_lea.hbm %s1, %s300
          %s302 = sshll.u32 %s294, 4
          %s303 = int_to_ptr.vmem [resolvable:$true] %s302
          %308 = dma.hbm_to_vmem [thread:$0]  %s301, 512, %s303, %s291, 256, 128, 8
        $region44: #{tpu_custom_call.1} parent=35 // pred_fallthru
          _
      $region36: #{tpu_custom_call.1} parent=5 // pred_fallthru
        _
      %p309 = scmp.le.s32.totalorder 1, %s23
      %p310 = scmp.lt.s32.totalorder %s23, 9
      %p311 = pnand %p309, %p310
      %p312 = pneg %p311
      // Predicated region
      $region45: #{tpu_custom_call.1} parent=5 // pred_check
        _
      $region46: #{tpu_custom_call.1} parent=5 // pred_check_branch
        %314 = sbr.rel (%p311) target = $region48
      $region47: #{tpu_custom_call.1} parent=5 // pred_region
        %s315 = ssub.s32 %s23, 1
        %s316 = sand.u32 %s57, 1
        %s317 = scalar_lea.sflag [#allocation7], %s316
        %s318 = sand.u32 %s57, 1
        %s319 = smul.addr %s318, 32
        %s320 = scalar_lea.vmem [#allocation6], %s319
        // Predicated region
        $region49: #{tpu_custom_call.1} parent=47 // pred_check
          %p321 = pneg %p70
        $region50: #{tpu_custom_call.1} parent=47 // pred_check_branch
          %323 = sbr.rel (%p321) target = $region52
        $region51: #{tpu_custom_call.1} parent=47 // pred_region
          %324 = dma.done %s317, 512
        $region52: #{tpu_custom_call.1} parent=47 // pred_fallthru
          _
        %s325 = sand.u32 %s85, 1
        %s326 = scalar_lea.sflag [#allocation10], %s325
        %s327 = sand.u32 %s85, 1
        %s328 = smul.addr %s327, 32
        %s329 = scalar_lea.vmem [#allocation9], %s328
        // Predicated region
        $region53: #{tpu_custom_call.1} parent=47 // pred_check
          %p330 = pneg %p98
        $region54: #{tpu_custom_call.1} parent=47 // pred_check_branch
          %332 = sbr.rel (%p330) target = $region56
        $region55: #{tpu_custom_call.1} parent=47 // pred_region
          %333 = dma.done %s326, 512
        $region56: #{tpu_custom_call.1} parent=47 // pred_fallthru
          _
        %s334 = sand.u32 %s57, 1
        %s335 = scalar_lea.sflag [#allocation7], %s334
        %s336 = sand.u32 %s57, 1
        %s337 = smul.addr %s336, 32
        %s338 = scalar_lea.vmem [#allocation6], %s337
        %p339 = pneg %p70
        %p340 = pneg %p67
        %s341 = sand.u32 %s85, 1
        %s342 = scalar_lea.sflag [#allocation10], %s341
        %s343 = sand.u32 %s85, 1
        %s344 = smul.addr %s343, 32
        %s345 = scalar_lea.vmem [#allocation9], %s344
        %p346 = pneg %p98
        %p347 = pneg %p95
        %p348 = pneg %p119
        %p349 = pneg %p116
        %p350 = pneg %p140
        %p351 = pneg %p137
        %p352 = pneg %p161
        %p353 = pneg %p158
        %p354 = pneg %p182
        %p355 = pneg %p179
        %p356 = pneg %p203
        %p357 = pneg %p200
        %p358 = pneg %p231
        %p359 = pneg %p228
        %s360 = sand.u32 %s218, 1
        %s361 = scalar_lea.sflag [#allocation8], %s360
        %s362 = sand.u32 %s218, 1
        %s363 = smul.addr %s362, 32
        %s364 = scalar_lea.vmem [#allocation11], %s363
        %p366 = scmp.eq.s32.totalorder %s35, 0
        // Predicated region
        $region57: #{tpu_custom_call.1} parent=47 // pred_check
          %p367 = pneg %p366
        $region58: #{tpu_custom_call.1} parent=47 // pred_check_branch
          %369 = sbr.rel (%p367) target = $region60
        $region59: #{tpu_custom_call.1} parent=47 // pred_region
          %370 = vst [vmem:[#allocation2] sm:$0x1] -inf
          %371 = vst [vmem:[#allocation3] sm:$0x1] 0.0
          %372 = vst [vmem:[#allocation4] sm:$0xff] 0.0
          %373 = vst [vmem:[#allocation4 + $0x8] sm:$0xff] 0.0
          %374 = vst [vmem:[#allocation4 + $0x10] sm:$0xff] 0.0
          %375 = vst [vmem:[#allocation4 + $0x18] sm:$0xff] 0.0
        $region60: #{tpu_custom_call.1} parent=47 // pred_fallthru
          _
        %v376 = vld [vmem:[%s320] sm:$0xff]
        %v377 = vld [vmem:[%s320 + $0x8] sm:$0xff]
        %v378 = vld [vmem:[%s320 + $0x10] sm:$0xff]
        %v379 = vld [vmem:[%s320 + $0x18] sm:$0xff]
        %v380 = vld [vmem:[%s329] sm:$0xff]
        %v381 = vld [vmem:[%s329 + $0x8] sm:$0xff]
        %v382 = vld [vmem:[%s329 + $0x10] sm:$0xff]
        %v383 = vld [vmem:[%s329 + $0x18] sm:$0xff]
        %v384 = vld [vmem:[%s2] sm:$0xf]
        %v385 = vpack.c.bf16 %v377, %v376
        %v386 = vpack.c.bf16 %v379, %v378
        %v387 = vld [vmem:[%s3] sm:$0xff]
        %389 = vset.pattern.permute.xlu0 0
        %390 = vperm.xlu0 %389, %v387
        %v391 = vpop.permute.xlu0 %390
        %vm393 = vcmask 261120
        %v395 = vsel %vm393, %v384, 0
        %397 = vmatprep.subr.bf16.mxu0 0
        %398 = vmatpush1.bf16.msra.mxu0 %v385
        %399 = vmatprep.subr.bf16.mxu0 0
        %400 = vmatpush1.bf16.msra.mxu0 %v386
        %401 = vmatprep.subr.bf16.mxu0 0
        %402 = vmatpush1.bf16.msra.mxu0 0
        %403 = vmatprep.subr.bf16.mxu0 0
        %404 = vmatpush1.bf16.msra.mxu0 0
        %405 = vmatprep.subr.bf16.mxu0 0
        %406 = vmatpush1.bf16.msra.mxu0 0
        %407 = vmatprep.subr.bf16.mxu0 0
        %408 = vmatpush1.bf16.msra.mxu0 0
        %409 = vmatprep.subr.bf16.mxu0 0
        %410 = vmatpush1.bf16.msra.mxu0 0
        %411 = vmatprep.subr.bf16.mxu0 0
        %412 = vmatpush1.bf16.msra.mxu0 0
        %413 = vmatprep.subr.bf16.mxu0 0
        %414 = vmatpush1.bf16.msra.mxu0 0
        %415 = vmatprep.subr.bf16.mxu0 0
        %416 = vmatpush1.bf16.msra.mxu0 0
        %417 = vmatprep.subr.bf16.mxu0 0
        %418 = vmatpush1.bf16.msra.mxu0 0
        %419 = vmatprep.subr.bf16.mxu0 0
        %420 = vmatpush1.bf16.msra.mxu0 0
        %421 = vmatprep.subr.bf16.mxu0 0
        %422 = vmatpush1.bf16.msra.mxu0 0
        %423 = vmatprep.subr.bf16.mxu0 0
        %424 = vmatpush1.bf16.msra.mxu0 0
        %425 = vmatprep.subr.bf16.mxu0 0
        %426 = vmatpush1.bf16.msra.mxu0 0
        %427 = vmatprep.subr.bf16.mxu0 0
        %428 = vmatpush1.bf16.msra.mxu0 0
        %429 = vmatprep.mubr.bf16.mxu0 0
        %430 = vmatmul.mubr.bf16.gmra.mrb[0].mxu0 %v395
        %v431 = vpop.f32.mrb[0].mxu0
        %v432 = vadd.f32 %v391, %v431
        %v433 = vpop.f32.mrb[0].mxu0
        %v434 = vpop.f32.mrb[0].mxu0
        %v435 = vpop.f32.mrb[0].mxu0
        %436 = vdwg.mxu0
        %v437 = vld [vmem:[%s4] sm:$0xf]
        %v438 = vld [vmem:[%s4 + $0x4] sm:$0xf]
        %v439 = vld [vmem:[%s4 + $0x8] sm:$0xf]
        %v440 = vld [vmem:[%s4 + $0xc] sm:$0xf]
        %v441 = vld [vmem:[%s4 + $0x10] sm:$0xf]
        %v442 = vpack.c.bf16 %v381, %v380
        %v443 = vpack.c.bf16 %v383, %v382
        %v444 = vld [vmem:[%s5] sm:$0xff]
        %v445 = vld [vmem:[%s5 + $0x8] sm:$0xff]
        %v446 = vld [vmem:[%s5 + $0x10] sm:$0xff]
        %v447 = vld [vmem:[%s5 + $0x18] sm:$0xff]
        %v448 = vld [vmem:[%s5 + $0x20] sm:$0xff]
        %450 = vset.pattern.permute.xlu0 0
        %451 = vperm.xlu0 %450, %v444
        %v452 = vpop.permute.xlu0 %451
        %455 = vset.pattern.permute.xlu0 0
        %456 = vperm.xlu0 %455, %v445
        %v457 = vpop.permute.xlu0 %456
        %460 = vset.pattern.permute.xlu0 0
        %461 = vperm.xlu0 %460, %v446
        %v462 = vpop.permute.xlu0 %461
        %465 = vset.pattern.permute.xlu0 0
        %466 = vperm.xlu0 %465, %v447
        %v467 = vpop.permute.xlu0 %466
        %470 = vset.pattern.permute.xlu0 0
        %471 = vperm.xlu0 %470, %v448
        %v472 = vpop.permute.xlu0 %471
        %v479 = vunpack.c.l.b16 %v437
        %v480 = vunpack.c.l.b16 %v438
        %v481 = vunpack.c.l.b16 %v439
        %v482 = vunpack.c.l.b16 %v440
        %v483 = vunpack.c.l.b16 %v441
        %v484 = vpack.c.b16 %v480, %v479
        %v485 = vpack.c.b16 %v482, %v481
        %v486 = vpack.c.b16 %v483, %v483
        %v488 = vsel %vm393, %v484, 0
        %v491 = vsel %vm393, %v485, 0
        %v494 = vsel %vm393, %v486, 0
        %496 = vmatprep.subr.bf16.mxu0 0
        %497 = vmatpush1.bf16.msra.mxu0 %v442
        %498 = vmatprep.subr.bf16.mxu0 0
        %499 = vmatpush1.bf16.msra.mxu0 %v443
        %500 = vmatprep.subr.bf16.mxu0 0
        %501 = vmatpush1.bf16.msra.mxu0 0
        %502 = vmatprep.subr.bf16.mxu0 0
        %503 = vmatpush1.bf16.msra.mxu0 0
        %504 = vmatprep.subr.bf16.mxu0 0
        %505 = vmatpush1.bf16.msra.mxu0 0
        %506 = vmatprep.subr.bf16.mxu0 0
        %507 = vmatpush1.bf16.msra.mxu0 0
        %508 = vmatprep.subr.bf16.mxu0 0
        %509 = vmatpush1.bf16.msra.mxu0 0
        %510 = vmatprep.subr.bf16.mxu0 0
        %511 = vmatpush1.bf16.msra.mxu0 0
        %512 = vmatprep.subr.bf16.mxu0 0
        %513 = vmatpush1.bf16.msra.mxu0 0
        %514 = vmatprep.subr.bf16.mxu0 0
        %515 = vmatpush1.bf16.msra.mxu0 0
        %516 = vmatprep.subr.bf16.mxu0 0
        %517 = vmatpush1.bf16.msra.mxu0 0
        %518 = vmatprep.subr.bf16.mxu0 0
        %519 = vmatpush1.bf16.msra.mxu0 0
        %520 = vmatprep.subr.bf16.mxu0 0
        %521 = vmatpush1.bf16.msra.mxu0 0
        %522 = vmatprep.subr.bf16.mxu0 0
        %523 = vmatpush1.bf16.msra.mxu0 0
        %524 = vmatprep.subr.bf16.mxu0 0
        %525 = vmatpush1.bf16.msra.mxu0 0
        %526 = vmatprep.subr.bf16.mxu0 0
        %527 = vmatpush1.bf16.msra.mxu0 0
        %528 = vmatprep.mubr.bf16.mxu0 0
        %529 = vmatmul.mubr.bf16.gmra.mrb[0].mxu0 %v488
        %v530 = vpop.f32.mrb[0].mxu0
        %v531 = vadd.f32 %v452, %v530
        %v532 = vpop.f32.mrb[0].mxu0
        %v533 = vpop.f32.mrb[0].mxu0
        %v534 = vadd.f32 %v457, %v533
        %v535 = vpop.f32.mrb[0].mxu0
        %536 = vmatprep.mubr.bf16.mxu0 0
        %537 = vmatmul.mubr.bf16.gmra.mrb[0].mxu0 %v491
        %v538 = vpop.f32.mrb[0].mxu0
        %v539 = vadd.f32 %v462, %v538
        %v540 = vpop.f32.mrb[0].mxu0
        %v541 = vpop.f32.mrb[0].mxu0
        %v542 = vadd.f32 %v467, %v541
        %v543 = vpop.f32.mrb[0].mxu0
        %544 = vmatprep.mubr.bf16.mxu0 0
        %545 = vmatmul.mubr.bf16.gmra.mrb[0].mxu0 %v494
        %v546 = vpop.f32.mrb[0].mxu0
        %v547 = vadd.f32 %v472, %v546
        %v548 = vpop.f32.mrb[0].mxu0
        %v549 = vpop.f32.mrb[0].mxu0
        %v550 = vpop.f32.mrb[0].mxu0
        %551 = vdwg.mxu0
        %552 = vxpose.xlu0.b32.start [1/16] %v531, 128
        %553 = vxpose.xlu0.b32.cont [2/16] 0.0, 128
        %554 = vxpose.xlu0.b32.cont [3/16] 0.0, 128
        %555 = vxpose.xlu0.b32.cont [4/16] 0.0, 128
        %556 = vxpose.xlu0.b32.cont [5/16] 0.0, 128
        %557 = vxpose.xlu0.b32.cont [6/16] 0.0, 128
        %558 = vxpose.xlu0.b32.cont [7/16] 0.0, 128
        %559 = vxpose.xlu0.b32.cont [8/16] 0.0, 128
        %560 = vxpose.xlu0.b32.cont [9/16] 0.0, 128
        %561 = vxpose.xlu0.b32.cont [10/16] 0.0, 128
        %562 = vxpose.xlu0.b32.cont [11/16] 0.0, 128
        %563 = vxpose.xlu0.b32.cont [12/16] 0.0, 128
        %564 = vxpose.xlu0.b32.cont [13/16] 0.0, 128
        %565 = vxpose.xlu0.b32.cont [14/16] 0.0, 128
        %566 = vxpose.xlu0.b32.cont [15/16] 0.0, 128
        %567 = vxpose.xlu0.b32.end [16/16] 0.0, 128
        %v568 = vpop.trf.xlu0
        %v569 = vpop.trf.xlu0
        %v570 = vpop.trf.xlu0
        %v571 = vpop.trf.xlu0
        %v572 = vpop.trf.xlu0
        %v573 = vpop.trf.xlu0
        %v574 = vpop.trf.xlu0
        %v575 = vpop.trf.xlu0
        %v576 = vpop.trf.xlu0
        %v577 = vpop.trf.xlu0
        %v578 = vpop.trf.xlu0
        %v579 = vpop.trf.xlu0
        %v580 = vpop.trf.xlu0
        %v581 = vpop.trf.xlu0
        %v582 = vpop.trf.xlu0
        %v583 = vpop.trf.xlu0
        %v584 = vpack.c.bf16 %v569, %v568
        %v585 = vpack.c.bf16 %v571, %v570
        %v586 = vpack.c.bf16 %v573, %v572
        %v587 = vpack.c.bf16 %v575, %v574
        %v588 = vpack.c.bf16 %v577, %v576
        %v589 = vpack.c.bf16 %v579, %v578
        %v590 = vpack.c.bf16 %v581, %v580
        %v591 = vpack.c.bf16 %v583, %v582
        %v592 = vpack.c.bf16 %v432, %v432
        %vm593 = vcmask 64512
        %v595 = vsel %vm593, %v584, 0
        %v598 = vsel %vm593, %v585, 0
        %v601 = vsel %vm593, %v586, 0
        %v604 = vsel %vm593, %v587, 0
        %v607 = vsel %vm593, %v588, 0
        %v610 = vsel %vm593, %v589, 0
        %v613 = vsel %vm593, %v590, 0
        %v616 = vsel %vm593, %v591, 0
        %vm618 = vcmask 1043456
        %v620 = vsel %vm618, %v592, 0
        %622 = vmatprep.subr.bf16.mxu0 0
        %623 = vmatpush1.bf16.msra.mxu0 %v620
        %624 = vmatprep.subr.bf16.mxu0 0
        %625 = vmatpush1.bf16.msra.mxu0 0
        %626 = vmatprep.subr.bf16.mxu0 0
        %627 = vmatpush1.bf16.msra.mxu0 0
        %628 = vmatprep.subr.bf16.mxu0 0
        %629 = vmatpush1.bf16.msra.mxu0 0
        %630 = vmatprep.subr.bf16.mxu0 0
        %631 = vmatpush1.bf16.msra.mxu0 0
        %632 = vmatprep.subr.bf16.mxu0 0
        %633 = vmatpush1.bf16.msra.mxu0 0
        %634 = vmatprep.subr.bf16.mxu0 0
        %635 = vmatpush1.bf16.msra.mxu0 0
        %636 = vmatprep.subr.bf16.mxu0 0
        %637 = vmatpush1.bf16.msra.mxu0 0
        %638 = vmatprep.subr.bf16.mxu0 0
        %639 = vmatpush1.bf16.msra.mxu0 0
        %640 = vmatprep.subr.bf16.mxu0 0
        %641 = vmatpush1.bf16.msra.mxu0 0
        %642 = vmatprep.subr.bf16.mxu0 0
        %643 = vmatpush1.bf16.msra.mxu0 0
        %644 = vmatprep.subr.bf16.mxu0 0
        %645 = vmatpush1.bf16.msra.mxu0 0
        %646 = vmatprep.subr.bf16.mxu0 0
        %647 = vmatpush1.bf16.msra.mxu0 0
        %648 = vmatprep.subr.bf16.mxu0 0
        %649 = vmatpush1.bf16.msra.mxu0 0
        %650 = vmatprep.subr.bf16.mxu0 0
        %651 = vmatpush1.bf16.msra.mxu0 0
        %652 = vmatprep.subr.bf16.mxu0 0
        %653 = vmatpush1.bf16.msra.mxu0 0
        %654 = vmatprep.mubr.bf16.mxu0 0
        %655 = vmatmul.mubr.bf16.gmra.mrb[0].mxu0 %v595
        %v656 = vpop.f32.mrb[0].mxu0
        %v657 = vadd.f32 0.0, %v656
        %v658 = vpop.f32.mrb[0].mxu0
        %v659 = vpop.f32.mrb[0].mxu0
        %v660 = vadd.f32 0.0, %v659
        %v661 = vpop.f32.mrb[0].mxu0
        %662 = vmatprep.mubr.bf16.mxu0 0
        %663 = vmatmul.mubr.bf16.gmra.mrb[0].mxu0 %v598
        %v664 = vpop.f32.mrb[0].mxu0
        %v665 = vadd.f32 0.0, %v664
        %v666 = vpop.f32.mrb[0].mxu0
        %v667 = vpop.f32.mrb[0].mxu0
        %v668 = vadd.f32 0.0, %v667
        %v669 = vpop.f32.mrb[0].mxu0
        %670 = vmatprep.mubr.bf16.mxu0 0
        %671 = vmatmul.mubr.bf16.gmra.mrb[0].mxu0 %v601
        %v672 = vpop.f32.mrb[0].mxu0
        %v673 = vadd.f32 0.0, %v672
        %v674 = vpop.f32.mrb[0].mxu0
        %v675 = vpop.f32.mrb[0].mxu0
        %v676 = vadd.f32 0.0, %v675
        %v677 = vpop.f32.mrb[0].mxu0
        %678 = vmatprep.mubr.bf16.mxu0 0
        %679 = vmatmul.mubr.bf16.gmra.mrb[0].mxu0 %v604
        %v680 = vpop.f32.mrb[0].mxu0
        %v681 = vadd.f32 0.0, %v680
        %v682 = vpop.f32.mrb[0].mxu0
        %v683 = vpop.f32.mrb[0].mxu0
        %v684 = vadd.f32 0.0, %v683
        %v685 = vpop.f32.mrb[0].mxu0
        %686 = vmatprep.mubr.bf16.mxu0 0
        %687 = vmatmul.mubr.bf16.gmra.mrb[0].mxu0 %v607
        %v688 = vpop.f32.mrb[0].mxu0
        %v689 = vadd.f32 0.0, %v688
        %v690 = vpop.f32.mrb[0].mxu0
        %v691 = vpop.f32.mrb[0].mxu0
        %v692 = vadd.f32 0.0, %v691
        %v693 = vpop.f32.mrb[0].mxu0
        %694 = vmatprep.mubr.bf16.mxu0 0
        %695 = vmatmul.mubr.bf16.gmra.mrb[0].mxu0 %v610
        %v696 = vpop.f32.mrb[0].mxu0
        %v697 = vadd.f32 0.0, %v696
        %v698 = vpop.f32.mrb[0].mxu0
        %v699 = vpop.f32.mrb[0].mxu0
        %v700 = vadd.f32 0.0, %v699
        %v701 = vpop.f32.mrb[0].mxu0
        %702 = vmatprep.mubr.bf16.mxu0 0
        %703 = vmatmul.mubr.bf16.gmra.mrb[0].mxu0 %v613
        %v704 = vpop.f32.mrb[0].mxu0
        %v705 = vadd.f32 0.0, %v704
        %v706 = vpop.f32.mrb[0].mxu0
        %v707 = vpop.f32.mrb[0].mxu0
        %v708 = vadd.f32 0.0, %v707
        %v709 = vpop.f32.mrb[0].mxu0
        %710 = vmatprep.mubr.bf16.mxu0 0
        %711 = vmatmul.mubr.bf16.gmra.mrb[0].mxu0 %v616
        %v712 = vpop.f32.mrb[0].mxu0
        %v713 = vadd.f32 0.0, %v712
        %v714 = vpop.f32.mrb[0].mxu0
        %v715 = vpop.f32.mrb[0].mxu0
        %v716 = vadd.f32 0.0, %v715
        %v717 = vpop.f32.mrb[0].mxu0
        %718 = vdwg.mxu0
        %v719 = vld [vmem:[#allocation2] sm:$0x1]
        %v720 = vmax.f32 %v657, %v673
        %v721 = vmax.f32 %v660, %v676
        %v722 = vmax.f32 %v665, %v681
        %v723 = vmax.f32 %v668, %v684
        %v724 = vmax.f32 %v720, %v689
        %v725 = vmax.f32 %v721, %v692
        %v726 = vmax.f32 %v722, %v697
        %v727 = vmax.f32 %v723, %v700
        %v728 = vmax.f32 %v724, %v705
        %v729 = vmax.f32 %v725, %v708
        %v730 = vmax.f32 %v726, %v713
        %v731 = vmax.f32 %v727, %v716
        %v732 = vmax.f32 %v728, %v729
        %v733 = vmax.f32 %v730, %v731
        %v734 = vmax.f32 %v732, %v733
        %v735 = vrot.slane %v734, 4
        %v736 = vmax.f32 %v734, %v735
        %v737 = vrot.slane %v736, 2
        %v738 = vmax.f32 %v736, %v737
        %v739 = vrot.slane %v738, 1
        %v740 = vmax.f32 %v738, %v739
        %v741 = vmax.f32 %v719, %v740
        %v743 = vlaneseq
        %v744 = vshrl.u32 %v743, 7
        %v745 = vsub.s32 0, %v744
        %v746 = vrot.slane %v741, %v745
        %v748 = vsub.f32 %v657, %v746
        %v749 = vsub.f32 %v660, %v746
        %v750 = vsub.f32 %v665, %v746
        %v751 = vsub.f32 %v668, %v746
        %v752 = vsub.f32 %v673, %v746
        %v753 = vsub.f32 %v676, %v746
        %v754 = vsub.f32 %v681, %v746
        %v755 = vsub.f32 %v684, %v746
        %v756 = vsub.f32 %v689, %v746
        %v757 = vsub.f32 %v692, %v746
        %v758 = vsub.f32 %v697, %v746
        %v759 = vsub.f32 %v700, %v746
        %v760 = vsub.f32 %v705, %v746
        %v761 = vsub.f32 %v708, %v746
        %v762 = vsub.f32 %v713, %v746
        %v763 = vsub.f32 %v716, %v746
        %v764 = vmul.f32 %v748, 1.442695
        %v765 = vpow.pop %v764
        %v766 = vmul.f32 %v749, 1.442695
        %v767 = vpow.pop %v766
        %v768 = vmul.f32 %v750, 1.442695
        %v769 = vpow.pop %v768
        %v770 = vmul.f32 %v751, 1.442695
        %v771 = vpow.pop %v770
        %v772 = vmul.f32 %v752, 1.442695
        %v773 = vpow.pop %v772
        %v774 = vmul.f32 %v753, 1.442695
        %v775 = vpow.pop %v774
        %v776 = vmul.f32 %v754, 1.442695
        %v777 = vpow.pop %v776
        %v778 = vmul.f32 %v755, 1.442695
        %v779 = vpow.pop %v778
        %v780 = vmul.f32 %v756, 1.442695
        %v781 = vpow.pop %v780
        %v782 = vmul.f32 %v757, 1.442695
        %v783 = vpow.pop %v782
        %v784 = vmul.f32 %v758, 1.442695
        %v785 = vpow.pop %v784
        %v786 = vmul.f32 %v759, 1.442695
        %v787 = vpow.pop %v786
        %v788 = vmul.f32 %v760, 1.442695
        %v789 = vpow.pop %v788
        %v790 = vmul.f32 %v761, 1.442695
        %v791 = vpow.pop %v790
        %v792 = vmul.f32 %v762, 1.442695
        %v793 = vpow.pop %v792
        %v794 = vmul.f32 %v763, 1.442695
        %v795 = vpow.pop %v794
        %v796 = vsub.f32 %v719, %v741
        %v797 = vmul.f32 %v796, 1.442695
        %v798 = vpow.pop %v797
        %v799 = vld [vmem:[#allocation3] sm:$0x1]
        %v800 = vmul.f32 %v798, %v799
        %v801 = vadd.f32 %v765, %v767
        %v802 = vadd.f32 %v801, %v769
        %v803 = vadd.f32 %v802, %v771
        %v804 = vadd.f32 %v803, %v773
        %v805 = vadd.f32 %v804, %v775
        %v806 = vadd.f32 %v805, %v777
        %v807 = vadd.f32 %v806, %v779
        %v808 = vadd.f32 %v807, %v781
        %v809 = vadd.f32 %v808, %v783
        %v810 = vadd.f32 %v809, %v785
        %v811 = vadd.f32 %v810, %v787
        %v812 = vadd.f32 %v811, %v789
        %v813 = vadd.f32 %v812, %v791
        %v814 = vadd.f32 %v813, %v793
        %v815 = vadd.f32 %v814, %v795
        %v816 = vrot.slane %v815, 4
        %v817 = vadd.f32 %v815, %v816
        %v818 = vrot.slane %v817, 2
        %v819 = vadd.f32 %v817, %v818
        %v820 = vrot.slane %v819, 1
        %v821 = vadd.f32 %v819, %v820
        %v822 = vadd.f32 %v800, %v821
        %823 = vst [vmem:[#allocation3] sm:$0x1] %v822
        %v824 = vld [vmem:[#allocation4] sm:$0xff]
        %v825 = vld [vmem:[#allocation4 + $0x8] sm:$0xff]
        %v826 = vld [vmem:[#allocation4 + $0x10] sm:$0xff]
        %v827 = vld [vmem:[#allocation4 + $0x18] sm:$0xff]
        %v829 = vlaneseq
        %v830 = vshrl.u32 %v829, 7
        %v831 = vsub.s32 0, %v830
        %v832 = vrot.slane %v798, %v831
        %v834 = vmul.f32 %v832, %v824
        %v835 = vmul.f32 %v832, %v825
        %v836 = vmul.f32 %v832, %v826
        %v837 = vmul.f32 %v832, %v827
        %v838 = vpack.c.bf16 %v539, %v534
        %v839 = vpack.c.bf16 %v547, %v542
        %v840 = vpack.c.bf16 %v767, %v765
        %v841 = vpack.c.bf16 %v771, %v769
        %v842 = vpack.c.bf16 %v775, %v773
        %v843 = vpack.c.bf16 %v779, %v777
        %v844 = vpack.c.bf16 %v783, %v781
        %v845 = vpack.c.bf16 %v787, %v785
        %v846 = vpack.c.bf16 %v791, %v789
        %v847 = vpack.c.bf16 %v795, %v793
        %848 = vmatprep.subr.bf16.mxu0 0
        %849 = vmatpush1.bf16.msra.mxu0 %v840
        %850 = vmatprep.subr.bf16.mxu0 0
        %851 = vmatpush1.bf16.msra.mxu0 %v841
        %852 = vmatprep.subr.bf16.mxu0 0
        %853 = vmatpush1.bf16.msra.mxu0 %v842
        %854 = vmatprep.subr.bf16.mxu0 0
        %855 = vmatpush1.bf16.msra.mxu0 %v843
        %856 = vmatprep.subr.bf16.mxu0 0
        %857 = vmatpush1.bf16.msra.mxu0 %v844
        %858 = vmatprep.subr.bf16.mxu0 0
        %859 = vmatpush1.bf16.msra.mxu0 %v845
        %860 = vmatprep.subr.bf16.mxu0 0
        %861 = vmatpush1.bf16.msra.mxu0 %v846
        %862 = vmatprep.subr.bf16.mxu0 0
        %863 = vmatpush1.bf16.msra.mxu0 %v847
        %864 = vmatprep.subr.bf16.mxu0 0
        %865 = vmatpush1.bf16.msra.mxu0 0
        %866 = vmatprep.subr.bf16.mxu0 0
        %867 = vmatpush1.bf16.msra.mxu0 0
        %868 = vmatprep.subr.bf16.mxu0 0
        %869 = vmatpush1.bf16.msra.mxu0 0
        %870 = vmatprep.subr.bf16.mxu0 0
        %871 = vmatpush1.bf16.msra.mxu0 0
        %872 = vmatprep.subr.bf16.mxu0 0
        %873 = vmatpush1.bf16.msra.mxu0 0
        %874 = vmatprep.subr.bf16.mxu0 0
        %875 = vmatpush1.bf16.msra.mxu0 0
        %876 = vmatprep.subr.bf16.mxu0 0
        %877 = vmatpush1.bf16.msra.mxu0 0
        %878 = vmatprep.subr.bf16.mxu0 0
        %879 = vmatpush1.bf16.msra.mxu0 0
        %880 = vmatprep.mubr.bf16.mxu0 0
        %881 = vmatmul.mubr.bf16.gmra.mrb[0].mxu0 %v838
        %v882 = vpop.f32.mrb[0].mxu0
        %v883 = vadd.f32 0.0, %v882
        %v884 = vpop.f32.mrb[0].mxu0
        %v885 = vpop.f32.mrb[0].mxu0
        %v886 = vadd.f32 0.0, %v885
        %v887 = vpop.f32.mrb[0].mxu0
        %888 = vmatprep.mubr.bf16.mxu0 0
        %889 = vmatmul.mubr.bf16.gmra.mrb[0].mxu0 %v839
        %v890 = vpop.f32.mrb[0].mxu0
        %v891 = vadd.f32 0.0, %v890
        %v892 = vpop.f32.mrb[0].mxu0
        %v893 = vpop.f32.mrb[0].mxu0
        %v894 = vadd.f32 0.0, %v893
        %v895 = vpop.f32.mrb[0].mxu0
        %896 = vdwg.mxu0
        %v897 = vadd.f32 %v834, %v883
        %v898 = vadd.f32 %v835, %v886
        %v899 = vadd.f32 %v836, %v891
        %v900 = vadd.f32 %v837, %v894
        %901 = vst [vmem:[#allocation4] sm:$0xff] %v897
        %902 = vst [vmem:[#allocation4 + $0x8] sm:$0xff] %v898
        %903 = vst [vmem:[#allocation4 + $0x10] sm:$0xff] %v899
        %904 = vst [vmem:[#allocation4 + $0x18] sm:$0xff] %v900
        %905 = vst [vmem:[#allocation2] sm:$0x1] %v741
        %p906 = scmp.eq.s32.totalorder %s35, 1
        // Predicated region
        $region61: #{tpu_custom_call.1} parent=47 // pred_check
          %p907 = pneg %p906
        $region62: #{tpu_custom_call.1} parent=47 // pred_check_branch
          %909 = sbr.rel (%p907) target = $region64
        $region63: #{tpu_custom_call.1} parent=47 // pred_region
          %s910 = sld [smem:[#allocation5]]
          %v911 = vld [vmem:[#allocation3] sm:$0x1]
          %v912 = vrcp.pop %v911
          %v913 = vld [vmem:[#allocation4] sm:$0xff]
          %v914 = vld [vmem:[#allocation4 + $0x8] sm:$0xff]
          %v915 = vld [vmem:[#allocation4 + $0x10] sm:$0xff]
          %v916 = vld [vmem:[#allocation4 + $0x18] sm:$0xff]
          %v918 = vlaneseq
          %v919 = vshrl.u32 %v918, 7
          %v920 = vsub.s32 0, %v919
          %v921 = vrot.slane %v912, %v920
          %v923 = vmul.f32 %v913, %v921
          %v924 = vmul.f32 %v914, %v921
          %v925 = vmul.f32 %v915, %v921
          %v926 = vmul.f32 %v916, %v921
          %v927 = vstv %s910
          %v928 = vmul.f32 %v927, %v923
          %v929 = vmul.f32 %v927, %v924
          %v930 = vmul.f32 %v927, %v925
          %v931 = vmul.f32 %v927, %v926
          %v932 = vadd.f32 %v928, %v376
          %v933 = vadd.f32 %v929, %v377
          %v934 = vadd.f32 %v930, %v378
          %v935 = vadd.f32 %v931, %v379
          %936 = vst [vmem:[%s364] sm:$0xff] %v932
          %937 = vst [vmem:[%s364 + $0x8] sm:$0xff] %v933
          %938 = vst [vmem:[%s364 + $0x10] sm:$0xff] %v934
          %939 = vst [vmem:[%s364 + $0x18] sm:$0xff] %v935
        $region64: #{tpu_custom_call.1} parent=47 // pred_fallthru
          _
        %s940 = sand.u32 %s218, 1
        %s941 = scalar_lea.sflag [#allocation8], %s940
        %s942 = sand.u32 %s218, 1
        %s943 = smul.addr %s942, 32
        %s944 = scalar_lea.vmem [#allocation11], %s943
        // Predicated region
        $region65: #{tpu_custom_call.1} parent=47 // pred_check
          %p945 = pneg %p228
        $region66: #{tpu_custom_call.1} parent=47 // pred_check_branch
          %947 = sbr.rel (%p945) target = $region68
        $region67: #{tpu_custom_call.1} parent=47 // pred_region
          %s949 = ssub.s32 512, 512
          %950 = vsyncadd %s941, %s949
          %s951 = smul.addr %s33, 8
          %s952 = sadd.s32 %s34, %s951
          %s953 = smul.addr %s952, 128
          %s954 = scalar_lea.hbm %s7, %s953
          %s955 = sshll.u32 %s944, 4
          %s956 = int_to_ptr.vmem [resolvable:$true] %s955
          %961 = dma.vmem_to_hbm [thread:$0]  %s956, 512, %s954, %s941, 128, 256, 8
        $region68: #{tpu_custom_call.1} parent=47 // pred_fallthru
          _
      $region48: #{tpu_custom_call.1} parent=5 // pred_fallthru
        _
      %p962 = scmp.le.s32.totalorder 2, %s23
      // Predicated region
      $region69: #{tpu_custom_call.1} parent=5 // pred_check
        %p963 = pneg %p962
      $region70: #{tpu_custom_call.1} parent=5 // pred_check_branch
        %965 = sbr.rel (%p963) target = $region72
      $region71: #{tpu_custom_call.1} parent=5 // pred_region
        %s966 = ssub.s32 %s23, 2
        // Predicated region
        $region73: #{tpu_custom_call.1} parent=71 // pred_check
          %p967 = pneg %p234
        $region74: #{tpu_custom_call.1} parent=71 // pred_check_branch
          %969 = sbr.rel (%p967) target = $region76
        $region75: #{tpu_custom_call.1} parent=71 // pred_region
          %s970 = sand.u32 %s219, 1
          %s971 = scalar_lea.sflag [#allocation8], %s970
          %s972 = sand.u32 %s219, 1
          %s973 = smul.addr %s972, 32
          %s974 = scalar_lea.vmem [#allocation11], %s973
          %975 = dma.done %s971, 512
        $region76: #{tpu_custom_call.1} parent=71 // pred_fallthru
          _
      $region72: #{tpu_custom_call.1} parent=5 // pred_fallthru
        _
    $region6: #{tpu_custom_call.1} parent=1 // loop_footer
      %s27 = sadd.s32 1, %s23
    $region7: #{tpu_custom_call.1} parent=1 // loop_footer_branch
      %22 = sbr.rel target = $region3
    $region8: #{tpu_custom_call.1} parent=1 // loop_exit
      _
    %976 = vsyncpa [#allocation7], 1
    %s977 = scalar_lea.sflag [#allocation7], 1
    %978 = vsyncpa %s977, 1
    %979 = vsyncpa [#allocation10], 1
    %s980 = scalar_lea.sflag [#allocation10], 1
    %981 = vsyncpa %s980, 1
    %982 = vsyncpa [#allocation8], 1
    %s983 = scalar_lea.sflag [#allocation8], 1
    %984 = vsyncpa %s983, 1

</llo_original>
